<compile_context>
chip_gen: v7x
topology: tpu7x:2x2x1
jax: 0.10.0
libtpu: 0.0.40
codegen_flags: <defaults>
</compile_context>

<pallas_src>
import math

import jax
import jax.numpy as jnp
from jax.experimental import pallas as pl
from jax.experimental.pallas import tpu as pltpu

_LANE = 128
_SUBLANE = 8


def _round_up(n, m):
    return ((n + m - 1) // m) * m


def _phys_bytes(rows, cols, bytes_per_elem=4):
    """Physical VMEM footprint of a 2-D f32 tile under (8,128) layout tiling."""
    return _round_up(rows, _SUBLANE) * _round_up(cols, _LANE) * bytes_per_elem


def qnetwork_kernel(x_ref, w0_ref, b0_ref, w1_ref, b1_ref, w2_ref, b2_ref, out_ref):
    """Fused MLP forward for one batch tile: fc0 -> relu -> fc1 -> relu -> fc2."""
    x = x_ref[...]

    h = jnp.dot(x, w0_ref[...], preferred_element_type=jnp.float32) + b0_ref[...]
    h = jnp.maximum(h, 0.0)
    h = jnp.dot(h, w1_ref[...], preferred_element_type=jnp.float32) + b1_ref[...]
    h = jnp.maximum(h, 0.0)
    h = jnp.dot(h, w2_ref[...], preferred_element_type=jnp.float32) + b2_ref[...]

    out_ref[...] = h.astype(out_ref.dtype)


def qnetwork_forward(x, params, *, block_batch=4096):
    """Run the fused QNetwork forward pass as a batch-tiled Pallas kernel.

    x      : [B, state_size] float32
    params : list of (W [in, out], b [1, out]) tuples, length 3 (two hidden layers).
    """
    assert len(params) == 3, "kernel is specialized for hidden_layers of length 2"
    B, state_size = x.shape
    H0 = params[0][0].shape[1]
    H1 = params[1][0].shape[1]
    action_size = params[2][0].shape[1]

    # Pad the batch only when it is not a sublane (8-row) multiple; large training
    # batches usually are, so no extra HBM pass is taken there.
    Bp = _round_up(max(B, _SUBLANE), _SUBLANE)
    if Bp != B:
        x = jnp.pad(x, ((0, Bp - B), (0, 0)))

    # Batch tile: large (amortizes per-grid-step overhead), a multiple of 8, capped so
    # the grid has >= 2 steps when possible (v7x dual-TensorCore sharding) and so VMEM
    # use stays a few MiB.  Ragged last tile is handled by Pallas masking.
    TB = min(_round_up(block_batch, _SUBLANE), 8192, Bp)
    if Bp >= 2 * _SUBLANE:
        TB = min(TB, _round_up((Bp + 1) // 2, _SUBLANE))
    grid = (pl.cdiv(Bp, TB),)

    (w0, b0), (w1, b1), (w2, b2) = params

    # Advisory cost estimate for the XLA scheduler.
    param_elems = sum(int(w.size) + int(b.size) for (w, b) in params)
    cost = pl.CostEstimate(
        flops=int(2 * Bp * (state_size * H0 + H0 * H1 + H1 * action_size)),
        transcendentals=0,
        bytes_accessed=int(4 * (Bp * state_size + Bp * action_size + param_elems)),
    )

    # VMEM budget with (8,128) physical-tiling accounting; capped at 48 MiB (safe on
    # v7x's 64 MiB VMEM per TensorCore, trivially fine on v5e/v6e's 128 MiB).
    param_phys = sum(_phys_bytes(*w.shape) + _phys_bytes(*b.shape) for (w, b) in params)
    vmem_est = (
        2 * _phys_bytes(TB, state_size)       # x tile, double-buffered
        + 2 * _phys_bytes(TB, action_size)    # out tile, double-buffered
        + 2 * param_phys                      # resident weights/biases (conservative x2)
        + 3 * _phys_bytes(TB, max(H0, H1))    # hidden-activation headroom
    )
    vmem_limit = int(min(max(2 * vmem_est, 8 * 1024 * 1024), 48 * 1024 * 1024))

    out = pl.pallas_call(
        qnetwork_kernel,
        out_shape=jax.ShapeDtypeStruct((Bp, action_size), jnp.float32),
        grid=grid,
        in_specs=[
            pl.BlockSpec((TB, state_size), lambda i: (i, 0)),    # x: tiled over batch
            pl.BlockSpec((state_size, H0), lambda i: (0, 0)),    # weights/biases: resident
            pl.BlockSpec((1, H0), lambda i: (0, 0)),
            pl.BlockSpec((H0, H1), lambda i: (0, 0)),
            pl.BlockSpec((1, H1), lambda i: (0, 0)),
            pl.BlockSpec((H1, action_size), lambda i: (0, 0)),
            pl.BlockSpec((1, action_size), lambda i: (0, 0)),
        ],
        out_specs=pl.BlockSpec((TB, action_size), lambda i: (i, 0)),
        compiler_params=pltpu.CompilerParams(
            dimension_semantics=("parallel",),
            vmem_limit_bytes=vmem_limit,
        ),
        cost_estimate=cost,
    )(x, w0, b0, w1, b1, w2, b2)

    # Strip the (tiny, <8-row) batch pad if one was applied; action dim is unpadded.
    return out if Bp == B else out[:B]


def init_params(key, state_size, action_size, hidden_layers=(64, 64)):
    """Deterministic init mimicking PyTorch nn.Linear default (uniform +-1/sqrt(fan_in))."""
    sizes = [state_size, *hidden_layers, action_size]
    params = []
    for i in range(len(sizes) - 1):
        fan_in, fan_out = sizes[i], sizes[i + 1]
        key, kw, kb = jax.random.split(key, 3)
        bound = 1.0 / math.sqrt(fan_in)
        # Stored as [in, out] (transposed relative to PyTorch's [out, in]).
        w = jax.random.uniform(kw, (fan_in, fan_out), jnp.float32, -bound, bound)
        b = jax.random.uniform(kb, (1, fan_out), jnp.float32, -bound, bound)
        params.append((w, b))
    return params


def reference_forward(x, params):
    """Plain-JAX reference matching the PyTorch forward semantics."""
    h = x
    for idx, (w, b) in enumerate(params):
        if idx > 0:
            h = jnp.maximum(h, 0.0)
        h = h @ w + b
    return h


if __name__ == "__main__":
    # Shapes consistent with the module defaults: state_size=8, hidden=(64,64), action_size=4.
    state_size = 8
    action_size = 4
    hidden_layers = (64, 64)

    key = jax.random.PRNGKey(0)
    key, kx_small, kx_big = jax.random.split(key, 3)
    params = init_params(key, state_size, action_size, hidden_layers)

    # Small inference-style batch (exercises the <8-row pad path).
    x_small = jax.random.normal(kx_small, (2, state_size), dtype=jnp.float32)
    out_small = jax.block_until_ready(qnetwork_forward(x_small, params))
    ref_small = reference_forward(x_small, params)
    assert out_small.shape == (2, action_size)
    assert jnp.allclose(out_small, ref_small, atol=1e-5, rtol=1e-5), "mismatch (small batch)"

    # Larger training-style batch: 2 grid steps with a ragged last tile (no wrapper pad).
    x_big = jax.random.normal(kx_big, (1000, state_size), dtype=jnp.float32)
    out_big = jax.block_until_ready(qnetwork_forward(x_big, params))
    ref_big = reference_forward(x_big, params)
    assert out_big.shape == (1000, action_size)
    assert jnp.allclose(out_big, ref_big, atol=1e-5, rtol=1e-5), "mismatch (large batch)"

    print("KERNEL_OK")
</pallas_src>

<mosaic_0001>
module attributes {stable_mosaic.version = 11 : i64} {
  func.func @qnetwork_kernel(%arg0: i32, %arg1: memref<8x8xf32, #tpu.memory_space<vmem>>, %arg2: memref<8x64xf32, #tpu.memory_space<vmem>>, %arg3: memref<1x64xf32, #tpu.memory_space<vmem>>, %arg4: memref<64x64xf32, #tpu.memory_space<vmem>>, %arg5: memref<1x64xf32, #tpu.memory_space<vmem>>, %arg6: memref<64x4xf32, #tpu.memory_space<vmem>>, %arg7: memref<1x4xf32, #tpu.memory_space<vmem>>, %arg8: memref<8x4xf32, #tpu.memory_space<vmem>>) attributes {dimension_semantics = [#tpu.dimension_semantics<parallel>], iteration_bounds = array<i64: 1>, scalar_prefetch = 0 : i64, scratch_operands = 0 : i64, tpu.core_type = #tpu.core_type<tc>, window_params = [{transform_indices = @transform_0, window_bounds = array<i64: 8, 8>}, {pipeline_mode = #tpu.pipeline_mode<synchronous>, transform_indices = @transform_1, window_bounds = array<i64: 8, 64>}, {pipeline_mode = #tpu.pipeline_mode<synchronous>, transform_indices = @transform_2, window_bounds = array<i64: 1, 64>}, {pipeline_mode = #tpu.pipeline_mode<synchronous>, transform_indices = @transform_3, window_bounds = array<i64: 64, 64>}, {pipeline_mode = #tpu.pipeline_mode<synchronous>, transform_indices = @transform_4, window_bounds = array<i64: 1, 64>}, {pipeline_mode = #tpu.pipeline_mode<synchronous>, transform_indices = @transform_5, window_bounds = array<i64: 64, 4>}, {pipeline_mode = #tpu.pipeline_mode<synchronous>, transform_indices = @transform_6, window_bounds = array<i64: 1, 4>}, {transform_indices = @transform_7, window_bounds = array<i64: 8, 4>}]} {
    %c0 = arith.constant 0 : index
    %c0_0 = arith.constant 0 : index
    %0 = vector.load %arg1[%c0, %c0_0] : memref<8x8xf32, #tpu.memory_space<vmem>>, vector<8x8xf32>
    %c0_1 = arith.constant 0 : index
    %c0_2 = arith.constant 0 : index
    %1 = vector.load %arg2[%c0_1, %c0_2] : memref<8x64xf32, #tpu.memory_space<vmem>>, vector<8x64xf32>
    %cst = arith.constant dense<0.000000e+00> : vector<8x64xf32>
    %2 = tpu.matmul %0, %1, %cst {dimension_numbers = #tpu.dot_dimension_numbers<[1], [0], [0], [1], [0, 0, 1, 1], [], []>} : vector<8x8xf32>, vector<8x64xf32>, vector<8x64xf32> -> vector<8x64xf32>
    %c0_3 = arith.constant 0 : index
    %c0_4 = arith.constant 0 : index
    %3 = vector.load %arg3[%c0_3, %c0_4] : memref<1x64xf32, #tpu.memory_space<vmem>>, vector<1x64xf32>
    %4 = vector.broadcast %3 : vector<1x64xf32> to vector<8x64xf32>
    %5 = arith.addf %2, %4 : vector<8x64xf32>
    %cst_5 = arith.constant 0.000000e+00 : f32
    %6 = vector.broadcast %cst_5 : f32 to vector<8x64xf32>
    %7 = arith.maximumf %5, %6 : vector<8x64xf32>
    %c0_6 = arith.constant 0 : index
    %c0_7 = arith.constant 0 : index
    %8 = vector.load %arg4[%c0_6, %c0_7] : memref<64x64xf32, #tpu.memory_space<vmem>>, vector<64x64xf32>
    %cst_8 = arith.constant dense<0.000000e+00> : vector<8x64xf32>
    %9 = tpu.matmul %7, %8, %cst_8 {dimension_numbers = #tpu.dot_dimension_numbers<[1], [0], [0], [1], [0, 0, 1, 1], [], []>} : vector<8x64xf32>, vector<64x64xf32>, vector<8x64xf32> -> vector<8x64xf32>
    %c0_9 = arith.constant 0 : index
    %c0_10 = arith.constant 0 : index
    %10 = vector.load %arg5[%c0_9, %c0_10] : memref<1x64xf32, #tpu.memory_space<vmem>>, vector<1x64xf32>
    %11 = vector.broadcast %10 : vector<1x64xf32> to vector<8x64xf32>
    %12 = arith.addf %9, %11 : vector<8x64xf32>
    %cst_11 = arith.constant 0.000000e+00 : f32
    %13 = vector.broadcast %cst_11 : f32 to vector<8x64xf32>
    %14 = arith.maximumf %12, %13 : vector<8x64xf32>
    %c0_12 = arith.constant 0 : index
    %c0_13 = arith.constant 0 : index
    %15 = vector.load %arg6[%c0_12, %c0_13] : memref<64x4xf32, #tpu.memory_space<vmem>>, vector<64x4xf32>
    %cst_14 = arith.constant dense<0.000000e+00> : vector<8x4xf32>
    %16 = tpu.matmul %14, %15, %cst_14 {dimension_numbers = #tpu.dot_dimension_numbers<[1], [0], [0], [1], [0, 0, 1, 1], [], []>} : vector<8x64xf32>, vector<64x4xf32>, vector<8x4xf32> -> vector<8x4xf32>
    %c0_15 = arith.constant 0 : index
    %c0_16 = arith.constant 0 : index
    %17 = vector.load %arg7[%c0_15, %c0_16] : memref<1x4xf32, #tpu.memory_space<vmem>>, vector<1x4xf32>
    %18 = vector.broadcast %17 : vector<1x4xf32> to vector<8x4xf32>
    %19 = arith.addf %16, %18 : vector<8x4xf32>
    %c0_17 = arith.constant 0 : index
    %c0_18 = arith.constant 0 : index
    %20 = vector.load %arg8[%c0_17, %c0_18] : memref<8x4xf32, #tpu.memory_space<vmem>>, vector<8x4xf32>
    tpu.vector_store %arg8[%c0_17, %c0_18], %19 {strides = array<i32>} : memref<8x4xf32, #tpu.memory_space<vmem>>, vector<8x4xf32>,
    return
  }
  func.func @transform_0(%arg0: i32) -> (i32, i32) {
    %c0_i32 = arith.constant 0 : i32
    %c0_i32_0 = arith.constant 0 : i32
    return %arg0, %c0_i32 : i32, i32
  }
  func.func @transform_1(%arg0: i32) -> (i32, i32) {
    %c0_i32 = arith.constant 0 : i32
    %c0_i32_0 = arith.constant 0 : i32
    %c0_i32_1 = arith.constant 0 : i32
    return %c0_i32, %c0_i32_0 : i32, i32
  }
  func.func @transform_2(%arg0: i32) -> (i32, i32) {
    %c0_i32 = arith.constant 0 : i32
    %c0_i32_0 = arith.constant 0 : i32
    %c0_i32_1 = arith.constant 0 : i32
    return %c0_i32, %c0_i32_0 : i32, i32
  }
  func.func @transform_3(%arg0: i32) -> (i32, i32) {
    %c0_i32 = arith.constant 0 : i32
    %c0_i32_0 = arith.constant 0 : i32
    %c0_i32_1 = arith.constant 0 : i32
    return %c0_i32, %c0_i32_0 : i32, i32
  }
  func.func @transform_4(%arg0: i32) -> (i32, i32) {
    %c0_i32 = arith.constant 0 : i32
    %c0_i32_0 = arith.constant 0 : i32
    %c0_i32_1 = arith.constant 0 : i32
    return %c0_i32, %c0_i32_0 : i32, i32
  }
  func.func @transform_5(%arg0: i32) -> (i32, i32) {
    %c0_i32 = arith.constant 0 : i32
    %c0_i32_0 = arith.constant 0 : i32
    %c0_i32_1 = arith.constant 0 : i32
    return %c0_i32, %c0_i32_0 : i32, i32
  }
  func.func @transform_6(%arg0: i32) -> (i32, i32) {
    %c0_i32 = arith.constant 0 : i32
    %c0_i32_0 = arith.constant 0 : i32
    %c0_i32_1 = arith.constant 0 : i32
    return %c0_i32, %c0_i32_0 : i32, i32
  }
  func.func @transform_7(%arg0: i32) -> (i32, i32) {
    %c0_i32 = arith.constant 0 : i32
    %c0_i32_0 = arith.constant 0 : i32
    return %arg0, %c0_i32 : i32, i32
  }
}

</mosaic_0001>

<llo_original>
// kernel: tpu_custom_call.1
$region0: #{tpu_custom_call.1}
  #allocation0 [shape = 'u32[]', space=smem, size = 0x4, offset = 0x4, fixed_abs, tag = 'smem constant byte address 0x4 - core index']
  #allocation1 [shape = 'u32[144,128]{1,0:T(1,128)}', space=vmem, size = 0x12000, scoped, tag = 'internal scratch']
  %s0 = inlined_call_operand.vmem [shape: f32[8,8], index: 0, kind: input, shape index: {}]
  %s1 = inlined_call_operand.hbm [shape: f32[8,64], index: 1, kind: input, shape index: {}]
  %s2 = inlined_call_operand.vmem [shape: f32[1,64], index: 2, kind: input, shape index: {}]
  %s3 = inlined_call_operand.vmem [shape: f32[64,64], index: 3, kind: input, shape index: {}]
  %s4 = inlined_call_operand.vmem [shape: f32[1,64], index: 4, kind: input, shape index: {}]
  %s5 = inlined_call_operand.vmem [shape: f32[64,4], index: 5, kind: input, shape index: {}]
  %s6 = inlined_call_operand.vmem [shape: f32[1,4], index: 6, kind: input, shape index: {}]
  %s7 = inlined_call_operand.vmem [shape: f32[8,4], index: 7, kind: output, shape index: {}]
  %s8 = sld [smem:[#allocation0]]
  $region42: #{tpu_custom_call.1} parent=0
    _
  %s10 = ssub.s32 1, %s8
  %s11 = scalar_select 0, %s10, %s8
  $region1: #{tpu_custom_call.1} parent=0
    #allocation2 [shape = 'u8[4096]{0}', space=vmem, size = 0x1000, scoped, tag = 'input window, operand 1, single buffered']
    #allocation3 [shape = 's32[1]{0}', space=sflag, size = 0x4, scoped, tag = 'scoped memory for tpu_custom_call.1']
    %12 = vsyncpa [#allocation3], 0
    // Predicated region
    $region2: #{tpu_custom_call.1} parent=1 // pred_check
      _
    $region3: #{tpu_custom_call.1} parent=1 // pred_check_branch
      %14 = sbr.rel (0) target = $region5
    $region4: #{tpu_custom_call.1} parent=1 // pred_region
      _
    $region5: #{tpu_custom_call.1} parent=1 // pred_fallthru
      _
    // Predicated region
    $region6: #{tpu_custom_call.1} parent=1 // pred_check
      _
    $region7: #{tpu_custom_call.1} parent=1 // pred_check_branch
      %16 = sbr.rel (0) target = $region9
    $region8: #{tpu_custom_call.1} parent=1 // pred_region
      %s18 = ssub.s32 128, 128
      %19 = vsyncadd [#allocation3], %s18
      %s21 = sshll.u32 [#allocation2], 4
      %s22 = int_to_ptr.vmem [resolvable:$true] %s21
      %24 = dma.hbm_to_vmem [thread:$0]  %s1, 128, %s22, [#allocation3]
    $region9: #{tpu_custom_call.1} parent=1 // pred_fallthru
      _
    // Predicated region
    $region10: #{tpu_custom_call.1} parent=1 // pred_check
      _
    $region11: #{tpu_custom_call.1} parent=1 // pred_check_branch
      %26 = sbr.rel (0) target = $region13
    $region12: #{tpu_custom_call.1} parent=1 // pred_region
      _
    $region13: #{tpu_custom_call.1} parent=1 // pred_fallthru
      _
    // Predicated region
    $region14: #{tpu_custom_call.1} parent=1 // pred_check
      _
    $region15: #{tpu_custom_call.1} parent=1 // pred_check_branch
      %28 = sbr.rel (0) target = $region17
    $region16: #{tpu_custom_call.1} parent=1 // pred_region
      _
    $region17: #{tpu_custom_call.1} parent=1 // pred_fallthru
      _
    // Predicated region
    $region18: #{tpu_custom_call.1} parent=1 // pred_check
      _
    $region19: #{tpu_custom_call.1} parent=1 // pred_check_branch
      %30 = sbr.rel (0) target = $region21
    $region20: #{tpu_custom_call.1} parent=1 // pred_region
      _
    $region21: #{tpu_custom_call.1} parent=1 // pred_fallthru
      _
    // Predicated region
    $region22: #{tpu_custom_call.1} parent=1 // pred_check
      _
    $region23: #{tpu_custom_call.1} parent=1 // pred_check_branch
      %32 = sbr.rel (0) target = $region25
    $region24: #{tpu_custom_call.1} parent=1 // pred_region
      _
    $region25: #{tpu_custom_call.1} parent=1 // pred_fallthru
      _
    // Predicated region
    $region26: #{tpu_custom_call.1} parent=1 // pred_check
      _
    $region27: #{tpu_custom_call.1} parent=1 // pred_check_branch
      %34 = sbr.rel (0) target = $region29
    $region28: #{tpu_custom_call.1} parent=1 // pred_region
      _
    $region29: #{tpu_custom_call.1} parent=1 // pred_fallthru
      _
    // Predicated region
    $region30: #{tpu_custom_call.1} parent=1 // pred_check
      _
    $region31: #{tpu_custom_call.1} parent=1 // pred_check_branch
      %36 = sbr.rel (0) target = $region33
    $region32: #{tpu_custom_call.1} parent=1 // pred_region
      %37 = dma.done [#allocation3], 128
    $region33: #{tpu_custom_call.1} parent=1 // pred_fallthru
      _
    %v38 = vld [vmem:[%s0] sm:$0xff]
    %v39 = vld [vmem:[#allocation2] sm:$0xff]
    %v40 = vld [vmem:[%s2] sm:$0x1]
    %v42 = vlaneseq
    %v43 = vshrl.u32 %v42, 7
    %v44 = vsub.s32 0, %v43
    %v45 = vrot.slane %v40, %v44
    %vm47 = vcmask 64512
    %v49 = vsel %vm47, %v38, 0
    %51 = vmatprep.subr.mxu0 0.0
    %52 = vmatpush1.msra.mxu0 %v39
    %53 = vmatprep.subr.mxu0 0.0
    %54 = vmatpush1.msra.mxu0 0.0
    %55 = vmatprep.subr.mxu0 0.0
    %56 = vmatpush1.msra.mxu0 0.0
    %57 = vmatprep.subr.mxu0 0.0
    %58 = vmatpush1.msra.mxu0 0.0
    %59 = vmatprep.subr.mxu0 0.0
    %60 = vmatpush1.msra.mxu0 0.0
    %61 = vmatprep.subr.mxu0 0.0
    %62 = vmatpush1.msra.mxu0 0.0
    %63 = vmatprep.subr.mxu0 0.0
    %64 = vmatpush1.msra.mxu0 0.0
    %65 = vmatprep.subr.mxu0 0.0
    %66 = vmatpush1.msra.mxu0 0.0
    %67 = vmatprep.subr.mxu0 0.0
    %68 = vmatpush1.msra.mxu0 0.0
    %69 = vmatprep.subr.mxu0 0.0
    %70 = vmatpush1.msra.mxu0 0.0
    %71 = vmatprep.subr.mxu0 0.0
    %72 = vmatpush1.msra.mxu0 0.0
    %73 = vmatprep.subr.mxu0 0.0
    %74 = vmatpush1.msra.mxu0 0.0
    %75 = vmatprep.subr.mxu0 0.0
    %76 = vmatpush1.msra.mxu0 0.0
    %77 = vmatprep.subr.mxu0 0.0
    %78 = vmatpush1.msra.mxu0 0.0
    %79 = vmatprep.subr.mxu0 0.0
    %80 = vmatpush1.msra.mxu0 0.0
    %81 = vmatprep.subr.mxu0 0.0
    %82 = vmatpush1.msra.mxu0 0.0
    %83 = vmatprep.subr.mxu0 0.0
    %84 = vmatpush1.msra.mxu0 0.0
    %85 = vmatprep.subr.mxu0 0.0
    %86 = vmatpush1.msra.mxu0 0.0
    %87 = vmatprep.subr.mxu0 0.0
    %88 = vmatpush1.msra.mxu0 0.0
    %89 = vmatprep.subr.mxu0 0.0
    %90 = vmatpush1.msra.mxu0 0.0
    %91 = vmatprep.subr.mxu0 0.0
    %92 = vmatpush1.msra.mxu0 0.0
    %93 = vmatprep.subr.mxu0 0.0
    %94 = vmatpush1.msra.mxu0 0.0
    %95 = vmatprep.subr.mxu0 0.0
    %96 = vmatpush1.msra.mxu0 0.0
    %97 = vmatprep.subr.mxu0 0.0
    %98 = vmatpush1.msra.mxu0 0.0
    %99 = vmatprep.subr.mxu0 0.0
    %100 = vmatpush1.msra.mxu0 0.0
    %101 = vmatprep.subr.mxu0 0.0
    %102 = vmatpush1.msra.mxu0 0.0
    %103 = vmatprep.subr.mxu0 0.0
    %104 = vmatpush1.msra.mxu0 0.0
    %105 = vmatprep.subr.mxu0 0.0
    %106 = vmatpush1.msra.mxu0 0.0
    %107 = vmatprep.subr.mxu0 0.0
    %108 = vmatpush1.msra.mxu0 0.0
    %109 = vmatprep.subr.mxu0 0.0
    %110 = vmatpush1.msra.mxu0 0.0
    %111 = vmatprep.subr.mxu0 0.0
    %112 = vmatpush1.msra.mxu0 0.0
    %113 = vmatprep.subr.mxu0 0.0
    %114 = vmatpush1.msra.mxu0 0.0
    %115 = vmatprep.mubr.f32.mxu0 0.0
    %116 = vmatmul.mubr.f32.gmra.mrb[0].mxu0 %v49
    %v117 = vpop.f32.mrb[0].mxu0
    %v118 = vadd.f32 %v45, %v117
    %v119 = vpop.f32.mrb[0].mxu0
    %120 = vdwg.mxu0
    %v121 = vmax.f32 %v118, 0.0
    %v122 = vld [vmem:[%s3] sm:$0xff]
    %v123 = vld [vmem:[%s3 + $0x8] sm:$0xff]
    %v124 = vld [vmem:[%s3 + $0x10] sm:$0xff]
    %v125 = vld [vmem:[%s3 + $0x18] sm:$0xff]
    %v126 = vld [vmem:[%s3 + $0x20] sm:$0xff]
    %v127 = vld [vmem:[%s3 + $0x28] sm:$0xff]
    %v128 = vld [vmem:[%s3 + $0x30] sm:$0xff]
    %v129 = vld [vmem:[%s3 + $0x38] sm:$0xff]
    %v130 = vld [vmem:[%s4] sm:$0x1]
    %v132 = vlaneseq
    %v133 = vshrl.u32 %v132, 7
    %v134 = vsub.s32 0, %v133
    %v135 = vrot.slane %v130, %v134
    %vm137 = vcmask 523264
    %v139 = vsel %vm137, %v121, 0
    %141 = vmatprep.subr.mxu0 0.0
    %142 = vmatpush1.msra.mxu0 %v122
    %143 = vmatprep.subr.mxu0 0.0
    %144 = vmatpush1.msra.mxu0 %v123
    %145 = vmatprep.subr.mxu0 0.0
    %146 = vmatpush1.msra.mxu0 %v124
    %147 = vmatprep.subr.mxu0 0.0
    %148 = vmatpush1.msra.mxu0 %v125
    %149 = vmatprep.subr.mxu0 0.0
    %150 = vmatpush1.msra.mxu0 %v126
    %151 = vmatprep.subr.mxu0 0.0
    %152 = vmatpush1.msra.mxu0 %v127
    %153 = vmatprep.subr.mxu0 0.0
    %154 = vmatpush1.msra.mxu0 %v128
    %155 = vmatprep.subr.mxu0 0.0
    %156 = vmatpush1.msra.mxu0 %v129
    %157 = vmatprep.subr.mxu0 0.0
    %158 = vmatpush1.msra.mxu0 0.0
    %159 = vmatprep.subr.mxu0 0.0
    %160 = vmatpush1.msra.mxu0 0.0
    %161 = vmatprep.subr.mxu0 0.0
    %162 = vmatpush1.msra.mxu0 0.0
    %163 = vmatprep.subr.mxu0 0.0
    %164 = vmatpush1.msra.mxu0 0.0
    %165 = vmatprep.subr.mxu0 0.0
    %166 = vmatpush1.msra.mxu0 0.0
    %167 = vmatprep.subr.mxu0 0.0
    %168 = vmatpush1.msra.mxu0 0.0
    %169 = vmatprep.subr.mxu0 0.0
    %170 = vmatpush1.msra.mxu0 0.0
    %171 = vmatprep.subr.mxu0 0.0
    %172 = vmatpush1.msra.mxu0 0.0
    %173 = vmatprep.subr.mxu0 0.0
    %174 = vmatpush1.msra.mxu0 0.0
    %175 = vmatprep.subr.mxu0 0.0
    %176 = vmatpush1.msra.mxu0 0.0
    %177 = vmatprep.subr.mxu0 0.0
    %178 = vmatpush1.msra.mxu0 0.0
    %179 = vmatprep.subr.mxu0 0.0
    %180 = vmatpush1.msra.mxu0 0.0
    %181 = vmatprep.subr.mxu0 0.0
    %182 = vmatpush1.msra.mxu0 0.0
    %183 = vmatprep.subr.mxu0 0.0
    %184 = vmatpush1.msra.mxu0 0.0
    %185 = vmatprep.subr.mxu0 0.0
    %186 = vmatpush1.msra.mxu0 0.0
    %187 = vmatprep.subr.mxu0 0.0
    %188 = vmatpush1.msra.mxu0 0.0
    %189 = vmatprep.subr.mxu0 0.0
    %190 = vmatpush1.msra.mxu0 0.0
    %191 = vmatprep.subr.mxu0 0.0
    %192 = vmatpush1.msra.mxu0 0.0
    %193 = vmatprep.subr.mxu0 0.0
    %194 = vmatpush1.msra.mxu0 0.0
    %195 = vmatprep.subr.mxu0 0.0
    %196 = vmatpush1.msra.mxu0 0.0
    %197 = vmatprep.subr.mxu0 0.0
    %198 = vmatpush1.msra.mxu0 0.0
    %199 = vmatprep.subr.mxu0 0.0
    %200 = vmatpush1.msra.mxu0 0.0
    %201 = vmatprep.subr.mxu0 0.0
    %202 = vmatpush1.msra.mxu0 0.0
    %203 = vmatprep.subr.mxu0 0.0
    %204 = vmatpush1.msra.mxu0 0.0
    %205 = vmatprep.mubr.f32.mxu0 0.0
    %206 = vmatmul.mubr.f32.gmra.mrb[0].mxu0 %v139
    %v207 = vpop.f32.mrb[0].mxu0
    %v208 = vadd.f32 %v135, %v207
    %v209 = vpop.f32.mrb[0].mxu0
    %210 = vdwg.mxu0
    %v211 = vmax.f32 %v208, 0.0
    %v212 = vld [vmem:[%s5] sm:$0xff]
    %v213 = vld [vmem:[%s5 + $0x8] sm:$0xff]
    %v214 = vld [vmem:[%s5 + $0x10] sm:$0xff]
    %v215 = vld [vmem:[%s5 + $0x18] sm:$0xff]
    %v216 = vld [vmem:[%s5 + $0x20] sm:$0xff]
    %v217 = vld [vmem:[%s5 + $0x28] sm:$0xff]
    %v218 = vld [vmem:[%s5 + $0x30] sm:$0xff]
    %v219 = vld [vmem:[%s5 + $0x38] sm:$0xff]
    %v220 = vld [vmem:[%s6] sm:$0x1]
    %v222 = vlaneseq
    %v223 = vshrl.u32 %v222, 7
    %v224 = vsub.s32 0, %v223
    %v225 = vrot.slane %v220, %v224
    %v228 = vsel %vm137, %v211, 0
    %230 = vmatprep.subr.mxu0 0.0
    %231 = vmatpush1.msra.mxu0 %v212
    %232 = vmatprep.subr.mxu0 0.0
    %233 = vmatpush1.msra.mxu0 %v213
    %234 = vmatprep.subr.mxu0 0.0
    %235 = vmatpush1.msra.mxu0 %v214
    %236 = vmatprep.subr.mxu0 0.0
    %237 = vmatpush1.msra.mxu0 %v215
    %238 = vmatprep.subr.mxu0 0.0
    %239 = vmatpush1.msra.mxu0 %v216
    %240 = vmatprep.subr.mxu0 0.0
    %241 = vmatpush1.msra.mxu0 %v217
    %242 = vmatprep.subr.mxu0 0.0
    %243 = vmatpush1.msra.mxu0 %v218
    %244 = vmatprep.subr.mxu0 0.0
    %245 = vmatpush1.msra.mxu0 %v219
    %246 = vmatprep.subr.mxu0 0.0
    %247 = vmatpush1.msra.mxu0 0.0
    %248 = vmatprep.subr.mxu0 0.0
    %249 = vmatpush1.msra.mxu0 0.0
    %250 = vmatprep.subr.mxu0 0.0
    %251 = vmatpush1.msra.mxu0 0.0
    %252 = vmatprep.subr.mxu0 0.0
    %253 = vmatpush1.msra.mxu0 0.0
    %254 = vmatprep.subr.mxu0 0.0
    %255 = vmatpush1.msra.mxu0 0.0
    %256 = vmatprep.subr.mxu0 0.0
    %257 = vmatpush1.msra.mxu0 0.0
    %258 = vmatprep.subr.mxu0 0.0
    %259 = vmatpush1.msra.mxu0 0.0
    %260 = vmatprep.subr.mxu0 0.0
    %261 = vmatpush1.msra.mxu0 0.0
    %262 = vmatprep.subr.mxu0 0.0
    %263 = vmatpush1.msra.mxu0 0.0
    %264 = vmatprep.subr.mxu0 0.0
    %265 = vmatpush1.msra.mxu0 0.0
    %266 = vmatprep.subr.mxu0 0.0
    %267 = vmatpush1.msra.mxu0 0.0
    %268 = vmatprep.subr.mxu0 0.0
    %269 = vmatpush1.msra.mxu0 0.0
    %270 = vmatprep.subr.mxu0 0.0
    %271 = vmatpush1.msra.mxu0 0.0
    %272 = vmatprep.subr.mxu0 0.0
    %273 = vmatpush1.msra.mxu0 0.0
    %274 = vmatprep.subr.mxu0 0.0
    %275 = vmatpush1.msra.mxu0 0.0
    %276 = vmatprep.subr.mxu0 0.0
    %277 = vmatpush1.msra.mxu0 0.0
    %278 = vmatprep.subr.mxu0 0.0
    %279 = vmatpush1.msra.mxu0 0.0
    %280 = vmatprep.subr.mxu0 0.0
    %281 = vmatpush1.msra.mxu0 0.0
    %282 = vmatprep.subr.mxu0 0.0
    %283 = vmatpush1.msra.mxu0 0.0
    %284 = vmatprep.subr.mxu0 0.0
    %285 = vmatpush1.msra.mxu0 0.0
    %286 = vmatprep.subr.mxu0 0.0
    %287 = vmatpush1.msra.mxu0 0.0
    %288 = vmatprep.subr.mxu0 0.0
    %289 = vmatpush1.msra.mxu0 0.0
    %290 = vmatprep.subr.mxu0 0.0
    %291 = vmatpush1.msra.mxu0 0.0
    %292 = vmatprep.subr.mxu0 0.0
    %293 = vmatpush1.msra.mxu0 0.0
    %294 = vmatprep.mubr.f32.mxu0 0.0
    %295 = vmatmul.mubr.f32.gmra.mrb[0].mxu0 %v228
    %v296 = vpop.f32.mrb[0].mxu0
    %v297 = vadd.f32 %v225, %v296
    %v298 = vpop.f32.mrb[0].mxu0
    %299 = vdwg.mxu0
    %vm300 = vcmask 31744
    %301 = vst.msk [vmem:[%s7] sm:$0xff] %vm300, %v297
    // Predicated region
    $region34: #{tpu_custom_call.1} parent=1 // pred_check
      _
    $region35: #{tpu_custom_call.1} parent=1 // pred_check_branch
      %303 = sbr.rel (0) target = $region37
    $region36: #{tpu_custom_call.1} parent=1 // pred_region
      _
    $region37: #{tpu_custom_call.1} parent=1 // pred_fallthru
      _
    // Predicated region
    $region38: #{tpu_custom_call.1} parent=1 // pred_check
      _
    $region39: #{tpu_custom_call.1} parent=1 // pred_check_branch
      %305 = sbr.rel (0) target = $region41
    $region40: #{tpu_custom_call.1} parent=1 // pred_region
      _
    $region41: #{tpu_custom_call.1} parent=1 // pred_fallthru
      _
    %306 = vsyncpa [#allocation3], 1

</llo_original>
